<compile_context>
chip_gen: v5e
topology: v5e:2x2
jax: 0.10.0
libtpu: 0.0.40
codegen_flags: <defaults>
</compile_context>

<pallas_src>
import functools

import jax
import jax.numpy as jnp
from jax.experimental import pallas as pl
from jax.experimental.pallas import tpu as pltpu


def _tversky_stats_kernel(preds_ref, gts_ref, out_ref,
                          tp_acc, sp_acc, oh_acc,
                          *, ignore_index, hw_total, tile_hw, compute_dtype):
    """One (batch, spatial-tile) grid step.

    preds_ref: (1, C, T)  logits tile (native dtype, upcast in-kernel)
    gts_ref:   (1, 1, T)  int32 labels tile
    out_ref:   (1, C, 3)  f32 per-batch [tp, fp, fn], written once per batch
    tp_acc/sp_acc/oh_acc: (C, 1) f32 VMEM scratch accumulators
    """
    h = pl.program_id(1)
    n_hw = pl.num_programs(1)

    @pl.when(h == 0)
    def _():
        tp_acc[...] = jnp.zeros_like(tp_acc)
        sp_acc[...] = jnp.zeros_like(sp_acc)
        oh_acc[...] = jnp.zeros_like(oh_acc)

    def accumulate(mask_tail):
        x = preds_ref[0].astype(compute_dtype)     # (C, T)
        g = gts_ref[0]                              # (1, T) int32

        if mask_tail:
            lane = jax.lax.broadcasted_iota(jnp.int32, g.shape, 1)     # (1, T)
            lane_valid = (h * tile_hw + lane) < hw_total               # (1, T)
            x = jnp.where(lane_valid, x, 0.0)       # keep exp finite in pad
        else:
            lane_valid = None

        # Softmax over the class (sublane) axis; approx reciprocal (EUP slot)
        # refined with two Newton steps on the (1, T) vector -> f32 accuracy.
        m = jnp.max(x, axis=0, keepdims=True)
        e = jnp.exp(x - m)
        s32 = jnp.sum(e, axis=0, keepdims=True).astype(jnp.float32)
        inv = pl.reciprocal(s32, approx=True)
        inv = inv * (2.0 - s32 * inv)
        inv = inv * (2.0 - s32 * inv)
        p = e * inv.astype(compute_dtype)           # (C, T)

        # tp = sum over pixels with label==c of p[c]
        # fp = sum(p[c]) - tp   (ignored pixels still count toward fp,
        #                        matching the PyTorch module)
        # fn = count(label==c & valid) - tp
        cls = jax.lax.broadcasted_iota(jnp.int32, p.shape, 0)           # (C, T)
        valid = g != ignore_index                                       # (1, T)
        if mask_tail:
            valid = jnp.logical_and(valid, lane_valid)
        mask = jnp.logical_and(cls == g, valid)                         # (C, T)

        tp = jnp.sum(jnp.where(mask, p, 0.0).astype(jnp.float32),
                     axis=1, keepdims=True)                             # (C, 1)
        p_for_sum = jnp.where(lane_valid, p, 0.0) if mask_tail else p
        sum_p = jnp.sum(p_for_sum.astype(jnp.float32),
                        axis=1, keepdims=True)                          # (C, 1)
        sum_oh = jnp.sum(mask.astype(jnp.float32), axis=1, keepdims=True)

        tp_acc[...] += tp
        sp_acc[...] += sum_p
        oh_acc[...] += sum_oh

    ragged = (hw_total % tile_hw) != 0              # static Python bool
    if ragged:
        # Masked code runs only on the final spatial tile (pl.when == scf.if),
        # keeping the per-tile VALU work minimal on all interior tiles.
        @pl.when(h < n_hw - 1)
        def _():
            accumulate(mask_tail=False)

        @pl.when(h == n_hw - 1)
        def _():
            accumulate(mask_tail=True)
    else:
        accumulate(mask_tail=False)

    @pl.when(h == n_hw - 1)
    def _():
        tpv = tp_acc[...]
        out_ref[0, :, 0:1] = tpv                    # tp
        out_ref[0, :, 1:2] = sp_acc[...] - tpv      # fp
        out_ref[0, :, 2:3] = oh_acc[...] - tpv      # fn


def _vmem_budget():
    """(vmem_capacity, tile_budget, tile_cap, vmem_ceiling) for this chip."""
    cap = 64 * 2**20                                # conservative default (v7x)
    try:
        cap = int(pltpu.get_tpu_info().vmem_capacity_bytes)
    except Exception:
        pass
    if cap <= 64 * 2**20:
        # v7x: 64 MiB per TC, two cores may be resident -> stay well clear.
        return cap, 40 * 2**20, 16384, 48 * 2**20
    # v5e / v6e: 128 MiB physical VMEM -> let tiles (and the limit) grow.
    return cap, 80 * 2**20, 32768, 100 * 2**20


def _per_lane_bytes(num_classes, in_itemsize, compute_itemsize):
    """Approx. VMEM bytes per spatial lane of tile: inputs + intermediates."""
    return (2 * (num_classes * in_itemsize + 4)      # 2x double-buffered tiles
            + 4 * num_classes * compute_itemsize     # x, e, p, select temps
            + 2 * num_classes * 4)                   # f32 temps feeding reduces


def _pick_tile_hw(num_classes, hw, in_itemsize, compute_itemsize,
                  tile_budget, tile_cap):
    """Largest lane-dense spatial tile within the VMEM budget; prefers a
    multiple-of-128 divisor of HW so the ragged branch compiles away."""
    per_lane = _per_lane_bytes(num_classes, in_itemsize, compute_itemsize)
    t_max = tile_budget // max(per_lane, 1)
    t_max = min(t_max, tile_cap)
    t_max = max(128, (t_max // 128) * 128)
    if hw <= t_max:
        return hw               # single full-extent block (always legal)
    if hw % 128 == 0:
        q = hw // 128
        for d in range(t_max // 128, 0, -1):
            if q % d == 0:
                tile = d * 128
                if tile >= 512:     # measured: >=512-lane tiles ~85% roofline
                    return tile
                break
    return t_max                # ragged; masking is confined to the last tile


def _tversky_stats(preds_bchw, gts_b1hw, *, ignore_index, tile_hw=None,
                   compute_dtype=jnp.float32, interpret=False):
    B, C, H, W = preds_bchw.shape
    HW = H * W
    preds = preds_bchw.reshape(B, C, HW)             # native dtype; upcast in-kernel
    gts = gts_b1hw.reshape(B, 1, HW).astype(jnp.int32)

    in_itemsize = jnp.dtype(preds.dtype).itemsize
    compute_itemsize = jnp.dtype(compute_dtype).itemsize
    _, tile_budget, tile_cap, vmem_ceiling = _vmem_budget()

    if tile_hw is None:
        tile_hw = _pick_tile_hw(C, HW, in_itemsize, compute_itemsize,
                                tile_budget, tile_cap)
    n_hw = pl.cdiv(HW, tile_hw)

    kernel = functools.partial(
        _tversky_stats_kernel,
        ignore_index=ignore_index, hw_total=HW, tile_hw=tile_hw,
        compute_dtype=compute_dtype)

    # Footprint-derived, generation-aware scoped-VMEM limit.
    per_lane = _per_lane_bytes(C, in_itemsize, compute_itemsize)
    footprint = (per_lane * tile_hw
                 + 3 * max(C, 8) * 128 * 4           # padded (C,1) scratch
                 + 2 * C * 3 * 4                     # tiny output tile
                 + (2 << 20))                        # margin / internal scratch
    vmem_limit = int(min(max(footprint, 32 * 2**20), vmem_ceiling))

    cost = pl.CostEstimate(
        flops=int(8 * B * C * HW),
        transcendentals=int(B * C * HW),
        bytes_accessed=int(B * C * HW * in_itemsize + B * HW * 4 + B * C * 3 * 4),
    )

    partials = pl.pallas_call(
        kernel,
        out_shape=jax.ShapeDtypeStruct((B, C, 3), jnp.float32),
        grid_spec=pltpu.PrefetchScalarGridSpec(
            num_scalar_prefetch=0,
            grid=(B, n_hw),
            in_specs=[
                pl.BlockSpec((1, C, tile_hw), lambda b, h: (b, 0, h)),
                pl.BlockSpec((1, 1, tile_hw), lambda b, h: (b, 0, h)),
            ],
            out_specs=pl.BlockSpec((1, C, 3), lambda b, h: (b, 0, 0)),
            scratch_shapes=[
                pltpu.VMEM((C, 1), jnp.float32),     # tp accumulator
                pltpu.VMEM((C, 1), jnp.float32),     # sum(p) accumulator
                pltpu.VMEM((C, 1), jnp.float32),     # sum(one-hot) accumulator
            ],
        ),
        compiler_params=pltpu.CompilerParams(
            dimension_semantics=("parallel", "arbitrary"),
            vmem_limit_bytes=vmem_limit),
        cost_estimate=cost,
        interpret=interpret,
    )(preds, gts)

    stats = partials.sum(axis=0)                     # (C, 3)
    return stats[:, 0], stats[:, 1], stats[:, 2]


def tversky_loss(
    preds,                  # (B, C, H, W) logits (pass bf16 to halve HBM traffic)
    gts,                    # (B, 1, H, W) int labels
    weight=None,            # (C,) or None
    num_classes=None,
    alpha=0.5,
    beta=0.5,
    gamma=1.0,
    reduction="mean",
    log_loss=False,
    normalize=False,
    smooth=0.0,
    ignore_index=-1,
    classes=None,           # optional (K,) int class-index gather
    eps=1e-7,
    tile_hw=None,           # optional spatial tile override
    compute_dtype=jnp.float32,   # jnp.bfloat16 is the fast path on v6e/v7x
    interpret=False,
):
    if preds.shape[0] == 0:
        return jnp.zeros((), dtype=jnp.float32)
    del num_classes  # implied by preds.shape[1]

    tp, fp, fn = _tversky_stats(preds, gts, ignore_index=ignore_index,
                                tile_hw=tile_hw, compute_dtype=compute_dtype,
                                interpret=interpret)

    if classes is not None:
        tp = tp[classes]
        fp = fp[classes]
        fn = fn[classes]

    tversky_index = jnp.maximum(
        (tp + smooth) / (tp + alpha * fp + beta * fn + smooth), eps)

    if log_loss:
        loss = -gamma * jnp.log(tversky_index)
    else:
        loss = jnp.power(1.0 - tversky_index, gamma)

    if weight is not None:
        loss = loss * weight
    if normalize:
        loss = loss / loss.sum()

    if reduction == "mean":
        return loss.mean()
    elif reduction == "sum":
        return loss.sum()
    else:
        raise ValueError("Invalid reduction method")


def _tversky_loss_ref(preds, gts, weight, alpha, beta, gamma, smooth,
                      ignore_index, eps):
    """Pure-JAX reference mirroring the PyTorch forward (mean reduction)."""
    B, C, H, W = preds.shape
    g = gts.reshape(B, H, W)
    p = jax.nn.softmax(preds.astype(jnp.float32), axis=1)        # (B,C,H,W)
    valid = (g != ignore_index)[:, None, :, :]                   # (B,1,H,W)
    onehot = (jax.nn.one_hot(g, C, axis=1) * valid).astype(jnp.float32)
    tp = jnp.sum(onehot * p, axis=(0, 2, 3))
    fp = jnp.sum(p * (1 - onehot), axis=(0, 2, 3))
    fn = jnp.sum(onehot * (1 - p), axis=(0, 2, 3))
    t = jnp.maximum((tp + smooth) / (tp + alpha * fp + beta * fn + smooth), eps)
    loss = jnp.power(1.0 - t, gamma)
    if weight is not None:
        loss = loss * weight
    return loss.mean()


if __name__ == "__main__":
    key = jax.random.PRNGKey(0)

    # --- case 1: evenly tiled spatial axis (auto tile + forced multi-tile) ---
    B, C, H, W = 2, 4, 16, 16
    k1, k2, key = jax.random.split(key, 3)
    preds = jax.random.normal(k1, (B, C, H, W), dtype=jnp.float32)
    gts = jax.random.randint(k2, (B, 1, H, W), 0, C, dtype=jnp.int32)
    gts = gts.at[0, 0, 0, :4].set(-1)           # exercise ignore_index path
    weight = jnp.linspace(0.5, 1.0, C, dtype=jnp.float32)

    ref = _tversky_loss_ref(preds, gts, weight, 0.5, 0.5, 1.0, 0.0, -1, 1e-7)

    loss_auto = tversky_loss(preds, gts, weight=weight, num_classes=C,
                             ignore_index=-1)
    loss_auto = jax.block_until_ready(loss_auto)
    assert jnp.allclose(loss_auto, ref, atol=1e-5, rtol=1e-5), (loss_auto, ref)

    loss_tiled = tversky_loss(preds, gts, weight=weight, num_classes=C,
                              ignore_index=-1, tile_hw=128)   # 2 spatial tiles
    loss_tiled = jax.block_until_ready(loss_tiled)
    assert jnp.allclose(loss_tiled, ref, atol=1e-5, rtol=1e-5), (loss_tiled, ref)

    # --- case 2: ragged tail (HW=144, tile=128), C=5 (non-multiple of 8) ---
    B2, C2, H2, W2 = 2, 5, 12, 12
    k3, k4, key = jax.random.split(key, 3)
    preds2 = jax.random.normal(k3, (B2, C2, H2, W2), dtype=jnp.float32)
    gts2 = jax.random.randint(k4, (B2, 1, H2, W2), 0, C2, dtype=jnp.int32)
    gts2 = gts2.at[1, 0, 3, :5].set(-1)

    ref2 = _tversky_loss_ref(preds2, gts2, None, 0.3, 0.7, 2.0, 1.0, -1, 1e-7)
    loss2 = tversky_loss(preds2, gts2, weight=None, num_classes=C2,
                         alpha=0.3, beta=0.7, gamma=2.0, smooth=1.0,
                         ignore_index=-1, tile_hw=128)
    loss2 = jax.block_until_ready(loss2)
    assert jnp.allclose(loss2, ref2, atol=1e-5, rtol=1e-5), (loss2, ref2)

    # --- case 3: bf16 logits at the pallas_call boundary (v5e HBM-traffic
    #             knob), f32 in-kernel compute ---
    preds_bf16 = preds.astype(jnp.bfloat16)
    ref3 = _tversky_loss_ref(preds_bf16.astype(jnp.float32), gts, weight,
                             0.5, 0.5, 1.0, 0.0, -1, 1e-7)
    loss3 = tversky_loss(preds_bf16, gts, weight=weight, num_classes=C,
                         ignore_index=-1)
    loss3 = jax.block_until_ready(loss3)
    assert jnp.allclose(loss3, ref3, atol=1e-5, rtol=1e-5), (loss3, ref3)

    # --- case 4: bf16 compute path (v6e/v7x fast path), validated in
    #             interpret mode; looser tolerance for bf16 softmax ---
    loss4 = tversky_loss(preds2, gts2, weight=None, num_classes=C2,
                         alpha=0.3, beta=0.7, gamma=2.0, smooth=1.0,
                         ignore_index=-1, compute_dtype=jnp.bfloat16,
                         interpret=True)
    loss4 = jax.block_until_ready(loss4)
    assert jnp.allclose(loss4, ref2, atol=3e-2, rtol=3e-2), (loss4, ref2)

    print("KERNEL_OK")
</pallas_src>

<mosaic_0001>
module attributes {stable_mosaic.version = 11 : i64} {
  func.func @_tversky_stats_kernel(%arg0: i32, %arg1: i32, %arg2: memref<1x4x256xf32, #tpu.memory_space<vmem>>, %arg3: memref<1x1x256xi32, #tpu.memory_space<vmem>>, %arg4: memref<1x4x3xf32, #tpu.memory_space<vmem>>, %arg5: memref<4x1xf32, #tpu.memory_space<vmem>>, %arg6: memref<4x1xf32, #tpu.memory_space<vmem>>, %arg7: memref<4x1xf32, #tpu.memory_space<vmem>>) attributes {dimension_semantics = [#tpu.dimension_semantics<parallel>, #tpu.dimension_semantics<arbitrary>], iteration_bounds = array<i64: 2, 1>, scalar_prefetch = 0 : i64, scratch_operands = 3 : i64, tpu.core_type = #tpu.core_type<tc>, window_params = [{transform_indices = @transform_0, window_bounds = array<i64: 1, 4, 256>}, {transform_indices = @transform_1, window_bounds = array<i64: 1, 1, 256>}, {transform_indices = @transform_2, window_bounds = array<i64: 1, 4, 3>}]} {
    %c0_i32 = arith.constant 0 : i32
    %0 = arith.cmpi eq, %arg1, %c0_i32 : i32
    %1 = arith.extui %0 : i1 to i32
    %c0_i32_0 = arith.constant 0 : i32
    %2 = arith.cmpi ne, %1, %c0_i32_0 : i32
    scf.if %2 {
      %cst_27 = arith.constant 0.000000e+00 : f32
      %54 = vector.broadcast %cst_27 : f32 to vector<4x1xf32>
      %c0_28 = arith.constant 0 : index
      %c0_29 = arith.constant 0 : index
      %55 = vector.load %arg5[%c0_28, %c0_29] : memref<4x1xf32, #tpu.memory_space<vmem>>, vector<4x1xf32>
      tpu.vector_store %arg5[%c0_28, %c0_29], %54 {strides = array<i32>} : memref<4x1xf32, #tpu.memory_space<vmem>>, vector<4x1xf32>,
      %cst_30 = arith.constant 0.000000e+00 : f32
      %56 = vector.broadcast %cst_30 : f32 to vector<4x1xf32>
      %c0_31 = arith.constant 0 : index
      %c0_32 = arith.constant 0 : index
      %57 = vector.load %arg6[%c0_31, %c0_32] : memref<4x1xf32, #tpu.memory_space<vmem>>, vector<4x1xf32>
      tpu.vector_store %arg6[%c0_31, %c0_32], %56 {strides = array<i32>} : memref<4x1xf32, #tpu.memory_space<vmem>>, vector<4x1xf32>,
      %cst_33 = arith.constant 0.000000e+00 : f32
      %58 = vector.broadcast %cst_33 : f32 to vector<4x1xf32>
      %c0_34 = arith.constant 0 : index
      %c0_35 = arith.constant 0 : index
      %59 = vector.load %arg7[%c0_34, %c0_35] : memref<4x1xf32, #tpu.memory_space<vmem>>, vector<4x1xf32>
      tpu.vector_store %arg7[%c0_34, %c0_35], %58 {strides = array<i32>} : memref<4x1xf32, #tpu.memory_space<vmem>>, vector<4x1xf32>,
    } else {
    }
    %c0 = arith.constant 0 : index
    %c0_1 = arith.constant 0 : index
    %c0_2 = arith.constant 0 : index
    %3 = vector.load %arg2[%c0, %c0_1, %c0_2] : memref<1x4x256xf32, #tpu.memory_space<vmem>>, vector<1x4x256xf32>
    %4 = vector.shape_cast %3 : vector<1x4x256xf32> to vector<4x256xf32>
    %c0_3 = arith.constant 0 : index
    %c0_4 = arith.constant 0 : index
    %c0_5 = arith.constant 0 : index
    %5 = vector.load %arg3[%c0_3, %c0_4, %c0_5] : memref<1x1x256xi32, #tpu.memory_space<vmem>>, vector<1x1x256xi32>
    %6 = vector.shape_cast %5 : vector<1x1x256xi32> to vector<1x256xi32>
    %cst = arith.constant dense<0xFF800000> : vector<256xf32>
    %7 = vector.multi_reduction <maximumf>, %4, %cst [0] : vector<4x256xf32> to vector<256xf32>
    %8 = vector.shape_cast %7 : vector<256xf32> to vector<1x256xf32>
    %9 = vector.broadcast %8 : vector<1x256xf32> to vector<4x256xf32>
    %10 = arith.subf %4, %9 : vector<4x256xf32>
    %11 = math.exp %10 : vector<4x256xf32>
    %cst_6 = arith.constant dense<0.000000e+00> : vector<256xf32>
    %12 = vector.multi_reduction <add>, %11, %cst_6 [0] : vector<4x256xf32> to vector<256xf32>
    %13 = vector.shape_cast %12 : vector<256xf32> to vector<1x256xf32>
    %14 = tpu.reciprocal %13 {approx = true} : vector<1x256xf32> -> vector<1x256xf32>
    %15 = arith.mulf %13, %14 : vector<1x256xf32>
    %cst_7 = arith.constant 2.000000e+00 : f32
    %16 = vector.broadcast %cst_7 : f32 to vector<1x256xf32>
    %17 = arith.subf %16, %15 : vector<1x256xf32>
    %18 = arith.mulf %14, %17 : vector<1x256xf32>
    %19 = arith.mulf %13, %18 : vector<1x256xf32>
    %cst_8 = arith.constant 2.000000e+00 : f32
    %20 = vector.broadcast %cst_8 : f32 to vector<1x256xf32>
    %21 = arith.subf %20, %19 : vector<1x256xf32>
    %22 = arith.mulf %18, %21 : vector<1x256xf32>
    %23 = vector.broadcast %22 : vector<1x256xf32> to vector<4x256xf32>
    %24 = arith.mulf %11, %23 : vector<4x256xf32>
    %25 = tpu.iota {dimensions = array<i32: 0>} : vector<4x256xi32>
    %c-1_i32 = arith.constant -1 : i32
    %26 = vector.broadcast %c-1_i32 : i32 to vector<1x256xi32>
    %27 = arith.cmpi ne, %6, %26 : vector<1x256xi32>
    %28 = vector.broadcast %6 : vector<1x256xi32> to vector<4x256xi32>
    %29 = arith.cmpi eq, %25, %28 : vector<4x256xi32>
    %30 = vector.broadcast %27 : vector<1x256xi1> to vector<4x256xi1>
    %31 = arith.andi %29, %30 : vector<4x256xi1>
    %cst_9 = arith.constant 0.000000e+00 : f32
    %32 = vector.broadcast %cst_9 : f32 to vector<4x256xf32>
    %33 = arith.select %31, %24, %32 : vector<4x256xi1>, vector<4x256xf32>
    %cst_10 = arith.constant dense<0.000000e+00> : vector<4xf32>
    %34 = vector.multi_reduction <add>, %33, %cst_10 [1] : vector<4x256xf32> to vector<4xf32>
    %35 = vector.shape_cast %34 : vector<4xf32> to vector<4x1xf32>
    %cst_11 = arith.constant dense<0.000000e+00> : vector<4xf32>
    %36 = vector.multi_reduction <add>, %24, %cst_11 [1] : vector<4x256xf32> to vector<4xf32>
    %37 = vector.shape_cast %36 : vector<4xf32> to vector<4x1xf32>
    %38 = arith.extui %31 : vector<4x256xi1> to vector<4x256xi32>
    %39 = arith.sitofp %38 : vector<4x256xi32> to vector<4x256xf32>
    %cst_12 = arith.constant dense<0.000000e+00> : vector<4xf32>
    %40 = vector.multi_reduction <add>, %39, %cst_12 [1] : vector<4x256xf32> to vector<4xf32>
    %41 = vector.shape_cast %40 : vector<4xf32> to vector<4x1xf32>
    %c0_13 = arith.constant 0 : index
    %c0_14 = arith.constant 0 : index
    %42 = vector.load %arg5[%c0_13, %c0_14] : memref<4x1xf32, #tpu.memory_space<vmem>>, vector<4x1xf32>
    %43 = arith.addf %42, %35 : vector<4x1xf32>
    %c0_15 = arith.constant 0 : index
    %c0_16 = arith.constant 0 : index
    %44 = vector.load %arg5[%c0_15, %c0_16] : memref<4x1xf32, #tpu.memory_space<vmem>>, vector<4x1xf32>
    tpu.vector_store %arg5[%c0_15, %c0_16], %43 {strides = array<i32>} : memref<4x1xf32, #tpu.memory_space<vmem>>, vector<4x1xf32>,
    %c0_17 = arith.constant 0 : index
    %c0_18 = arith.constant 0 : index
    %45 = vector.load %arg6[%c0_17, %c0_18] : memref<4x1xf32, #tpu.memory_space<vmem>>, vector<4x1xf32>
    %46 = arith.addf %45, %37 : vector<4x1xf32>
    %c0_19 = arith.constant 0 : index
    %c0_20 = arith.constant 0 : index
    %47 = vector.load %arg6[%c0_19, %c0_20] : memref<4x1xf32, #tpu.memory_space<vmem>>, vector<4x1xf32>
    tpu.vector_store %arg6[%c0_19, %c0_20], %46 {strides = array<i32>} : memref<4x1xf32, #tpu.memory_space<vmem>>, vector<4x1xf32>,
    %c0_21 = arith.constant 0 : index
    %c0_22 = arith.constant 0 : index
    %48 = vector.load %arg7[%c0_21, %c0_22] : memref<4x1xf32, #tpu.memory_space<vmem>>, vector<4x1xf32>
    %49 = arith.addf %48, %41 : vector<4x1xf32>
    %c0_23 = arith.constant 0 : index
    %c0_24 = arith.constant 0 : index
    %50 = vector.load %arg7[%c0_23, %c0_24] : memref<4x1xf32, #tpu.memory_space<vmem>>, vector<4x1xf32>
    tpu.vector_store %arg7[%c0_23, %c0_24], %49 {strides = array<i32>} : memref<4x1xf32, #tpu.memory_space<vmem>>, vector<4x1xf32>,
    %c0_i32_25 = arith.constant 0 : i32
    %51 = arith.cmpi eq, %arg1, %c0_i32_25 : i32
    %52 = arith.extui %51 : i1 to i32
    %c0_i32_26 = arith.constant 0 : i32
    %53 = arith.cmpi ne, %52, %c0_i32_26 : i32
    scf.if %53 {
      %c0_27 = arith.constant 0 : index
      %c0_28 = arith.constant 0 : index
      %54 = vector.load %arg5[%c0_27, %c0_28] : memref<4x1xf32, #tpu.memory_space<vmem>>, vector<4x1xf32>
      %c0_29 = arith.constant 0 : index
      %c0_30 = arith.constant 0 : index
      %c0_31 = arith.constant 0 : index
      %55 = vector.load %arg4[%c0_29, %c0_30, %c0_31] : memref<1x4x3xf32, #tpu.memory_space<vmem>>, vector<1x4x1xf32>
      %56 = vector.shape_cast %55 : vector<1x4x1xf32> to vector<4x1xf32>
      %57 = vector.shape_cast %54 : vector<4x1xf32> to vector<1x4x1xf32>
      tpu.vector_store %arg4[%c0_29, %c0_30, %c0_31], %57 {strides = array<i32>} : memref<1x4x3xf32, #tpu.memory_space<vmem>>, vector<1x4x1xf32>,
      %c0_32 = arith.constant 0 : index
      %c0_33 = arith.constant 0 : index
      %58 = vector.load %arg6[%c0_32, %c0_33] : memref<4x1xf32, #tpu.memory_space<vmem>>, vector<4x1xf32>
      %59 = arith.subf %58, %54 : vector<4x1xf32>
      %c0_34 = arith.constant 0 : index
      %c0_35 = arith.constant 0 : index
      %c1 = arith.constant 1 : index
      %60 = vector.load %arg4[%c0_34, %c0_35, %c1] : memref<1x4x3xf32, #tpu.memory_space<vmem>>, vector<1x4x1xf32>
      %61 = vector.shape_cast %60 : vector<1x4x1xf32> to vector<4x1xf32>
      %62 = vector.shape_cast %59 : vector<4x1xf32> to vector<1x4x1xf32>
      tpu.vector_store %arg4[%c0_34, %c0_35, %c1], %62 {strides = array<i32>} : memref<1x4x3xf32, #tpu.memory_space<vmem>>, vector<1x4x1xf32>,
      %c0_36 = arith.constant 0 : index
      %c0_37 = arith.constant 0 : index
      %63 = vector.load %arg7[%c0_36, %c0_37] : memref<4x1xf32, #tpu.memory_space<vmem>>, vector<4x1xf32>
      %64 = arith.subf %63, %54 : vector<4x1xf32>
      %c0_38 = arith.constant 0 : index
      %c0_39 = arith.constant 0 : index
      %c2 = arith.constant 2 : index
      %65 = vector.load %arg4[%c0_38, %c0_39, %c2] : memref<1x4x3xf32, #tpu.memory_space<vmem>>, vector<1x4x1xf32>
      %66 = vector.shape_cast %65 : vector<1x4x1xf32> to vector<4x1xf32>
      %67 = vector.shape_cast %64 : vector<4x1xf32> to vector<1x4x1xf32>
      tpu.vector_store %arg4[%c0_38, %c0_39, %c2], %67 {strides = array<i32>} : memref<1x4x3xf32, #tpu.memory_space<vmem>>, vector<1x4x1xf32>,
    } else {
    }
    return
  }
  func.func @transform_0(%arg0: i32, %arg1: i32) -> (i32, i32, i32) {
    %c0_i32 = arith.constant 0 : i32
    %c0_i32_0 = arith.constant 0 : i32
    return %arg0, %c0_i32, %arg1 : i32, i32, i32
  }
  func.func @transform_1(%arg0: i32, %arg1: i32) -> (i32, i32, i32) {
    %c0_i32 = arith.constant 0 : i32
    %c0_i32_0 = arith.constant 0 : i32
    return %arg0, %c0_i32, %arg1 : i32, i32, i32
  }
  func.func @transform_2(%arg0: i32, %arg1: i32) -> (i32, i32, i32) {
    %c0_i32 = arith.constant 0 : i32
    %c0_i32_0 = arith.constant 0 : i32
    %c0_i32_1 = arith.constant 0 : i32
    return %arg0, %c0_i32, %c0_i32_0 : i32, i32, i32
  }
}

</mosaic_0001>

<llo_original>
// kernel: tpu_custom_call.1
$region0: #{tpu_custom_call.1}
  #allocation0 [shape = 'u32[]', space=smem, size = 0x4, offset = 0x4, fixed_abs, tag = 'smem constant byte address 0x4 - core index']
  #allocation1 [shape = 'u32[72,128]{1,0:T(1,128)}', space=vmem, size = 0x9000, scoped, tag = 'internal scratch']
  #allocation2 [shape = 'f32[4,1]{1,0:T(4,128)}', space=vmem, size = 0x800, scoped, tag = 'scratch operand']
  #allocation3 [shape = 'f32[4,1]{1,0:T(4,128)}', space=vmem, size = 0x800, scoped, tag = 'scratch operand']
  #allocation4 [shape = 'f32[4,1]{1,0:T(4,128)}', space=vmem, size = 0x800, scoped, tag = 'scratch operand']
  %s0 = inlined_call_operand.hbm [shape: f32[2,4,256], index: 0, kind: input, shape index: {}]
  %s1 = inlined_call_operand.hbm [shape: s32[2,1,256], index: 1, kind: input, shape index: {}]
  %s2 = inlined_call_operand.vmem [shape: f32[2,4,3], index: 2, kind: output, shape index: {}]
  %s3 = sld [smem:[#allocation0]]
  $region57: #{tpu_custom_call.1} parent=0
    _
  %s5 = ssub.s32 1, %s3
  %s6 = scalar_select 0, %s5, %s3
  $region1: #{tpu_custom_call.1} parent=0
    #allocation5 [shape = 'u8[8192]{0}', space=vmem, size = 0x2000, scoped, tag = 'input window, operand 0']
    #allocation6 [shape = 's32[2]{0}', space=sflag, size = 0x8, scoped, tag = 'scoped memory for tpu_custom_call.1']
    #allocation7 [shape = 'u8[2048]{0}', space=vmem, size = 0x800, scoped, tag = 'input window, operand 1']
    #allocation8 [shape = 's32[2]{0}', space=sflag, size = 0x8, scoped, tag = 'scoped memory for tpu_custom_call.1']
    %7 = vsyncpa [#allocation6], 0
    %s8 = scalar_lea.sflag [#allocation6], 1
    %9 = vsyncpa %s8, 0
    %10 = vsyncpa [#allocation8], 0
    %s11 = scalar_lea.sflag [#allocation8], 1
    %12 = vsyncpa %s11, 0
    loop: start=0, step=1, limit=4
    $region2: #{tpu_custom_call.1} parent=1 // loop_pre_header
      _
    $region3: #{tpu_custom_call.1} parent=1 // loop_header
      %s14 = sphi 0, %s18
      %p15 = scmp.ge.s32.totalorder %s14, 4
      %s21 = sphi 0, %s33
      %s22 = sphi 0, %s29
      %s23 = sphi 0, %s21
      %s24 = sphi 0, %s22
      %s25 = sphi 0, %s23
      %s26 = sphi 0, %s24
      %s38 = sphi 0, %s40
      %s41 = sphi 0, %s38
      %s42 = sphi 0, %s41
      %s58 = sphi 0, %s42
      %s66 = sphi 0, %s68
      %s69 = sphi 0, %s66
      %s70 = sphi 0, %s69
      %s86 = sphi 0, %s70
      %s92 = sphi 0, %s94
      %s95 = sphi 0, %s92
      %s96 = sphi 0, %s95
      %s112 = sphi 0, %s96
    $region4: #{tpu_custom_call.1} parent=1 // loop_header_branch
      %17 = sbr.rel (%p15) target = $region8
    $region5: #{tpu_custom_call.1} parent=1 // loop_body
      %s19 = ssub.s32 %s14, 1
      %s20 = ssub.s32 %s14, 2
      %s27 = sadd.s32 1, %s22
      %p28 = scmp.ge.s32.totalorder %s27, 1
      %s29 = scalar_select %p28, 0, %s27
      %s30 = sadd.s32 1, %s21
      %s31 = scalar_select %p28, %s30, %s21
      %p32 = scmp.ge.s32.totalorder %s31, 2
      %s33 = scalar_select %p32, 0, %s31
      %s34 = ssub.s32 %s21, %s33
      %s35 = ssub.s32 %s22, %s29
      %s36 = sor.u32 %s34, %s35
      %p37 = scmp.eq.s32.totalorder %s36, 0
      %s39 = sadd.s32 %s38, 1
      %s40 = scalar_select %p37, %s38, %s39
      %p43 = pneg %p37
      %p44 = scmp.eq.s32.totalorder %s14, 1
      %p45 = por %p43, %p44
      %p46 = scmp.ne.s32.totalorder %s38, %s41
      %p47 = scmp.eq.s32.totalorder %s14, 0
      %p48 = por %p46, %p47
      %p49 = scmp.ne.s32.totalorder %s38, %s41
      %p50 = scmp.eq.s32.totalorder %s19, 1
      %p51 = por %p49, %p50
      %p52 = scmp.ne.s32.totalorder %s41, %s42
      %p53 = scmp.eq.s32.totalorder %s19, 0
      %p54 = por %p52, %p53
      %p55 = scmp.ne.s32.totalorder %s41, %s42
      %p56 = scmp.eq.s32.totalorder %s20, 1
      %p57 = por %p55, %p56
      %p59 = scmp.ne.s32.totalorder %s42, %s58
      %p60 = scmp.eq.s32.totalorder %s20, 0
      %p61 = por %p59, %p60
      %s62 = ssub.s32 %s21, %s33
      %s63 = ssub.s32 %s22, %s29
      %s64 = sor.u32 %s62, %s63
      %p65 = scmp.eq.s32.totalorder %s64, 0
      %s67 = sadd.s32 %s66, 1
      %s68 = scalar_select %p65, %s66, %s67
      %p71 = pneg %p65
      %p72 = scmp.eq.s32.totalorder %s14, 1
      %p73 = por %p71, %p72
      %p74 = scmp.ne.s32.totalorder %s66, %s69
      %p75 = scmp.eq.s32.totalorder %s14, 0
      %p76 = por %p74, %p75
      %p77 = scmp.ne.s32.totalorder %s66, %s69
      %p78 = scmp.eq.s32.totalorder %s19, 1
      %p79 = por %p77, %p78
      %p80 = scmp.ne.s32.totalorder %s69, %s70
      %p81 = scmp.eq.s32.totalorder %s19, 0
      %p82 = por %p80, %p81
      %p83 = scmp.ne.s32.totalorder %s69, %s70
      %p84 = scmp.eq.s32.totalorder %s20, 1
      %p85 = por %p83, %p84
      %p87 = scmp.ne.s32.totalorder %s70, %s86
      %p88 = scmp.eq.s32.totalorder %s20, 0
      %p89 = por %p87, %p88
      %s90 = ssub.s32 %s21, %s33
      %p91 = scmp.eq.s32.totalorder %s90, 0
      %s93 = sadd.s32 %s92, 1
      %s94 = scalar_select %p91, %s92, %s93
      %p97 = pneg %p91
      %p98 = scmp.eq.s32.totalorder %s14, 1
      %p99 = por %p97, %p98
      %p100 = scmp.ne.s32.totalorder %s92, %s95
      %p101 = scmp.eq.s32.totalorder %s14, 0
      %p102 = por %p100, %p101
      %p103 = scmp.ne.s32.totalorder %s92, %s95
      %p104 = scmp.eq.s32.totalorder %s19, 1
      %p105 = por %p103, %p104
      %p106 = scmp.ne.s32.totalorder %s95, %s96
      %p107 = scmp.eq.s32.totalorder %s19, 0
      %p108 = por %p106, %p107
      %p109 = scmp.ne.s32.totalorder %s95, %s96
      %p110 = scmp.eq.s32.totalorder %s20, 1
      %p111 = por %p109, %p110
      %p113 = scmp.ne.s32.totalorder %s96, %s112
      %p114 = scmp.eq.s32.totalorder %s20, 0
      %p115 = por %p113, %p114
      %p116 = scmp.le.s32.totalorder 1, %s14
      %p117 = scmp.lt.s32.totalorder %s14, 3
      %p118 = pnand %p116, %p117
      %p119 = pneg %p118
      // Predicated region
      $region9: #{tpu_custom_call.1} parent=5 // pred_check
        _
      $region10: #{tpu_custom_call.1} parent=5 // pred_check_branch
        %121 = sbr.rel (%p118) target = $region12
      $region11: #{tpu_custom_call.1} parent=5 // pred_region
        %s122 = ssub.s32 %s14, 1
      $region12: #{tpu_custom_call.1} parent=5 // pred_fallthru
        _
      %p123 = scmp.lt.s32.totalorder %s14, 2
      // Predicated region
      $region13: #{tpu_custom_call.1} parent=5 // pred_check
        %p124 = pneg %p123
      $region14: #{tpu_custom_call.1} parent=5 // pred_check_branch
        %126 = sbr.rel (%p124) target = $region16
      $region15: #{tpu_custom_call.1} parent=5 // pred_region
        // Predicated region
        $region17: #{tpu_custom_call.1} parent=15 // pred_check
          %p127 = pneg %p48
        $region18: #{tpu_custom_call.1} parent=15 // pred_check_branch
          %129 = sbr.rel (%p127) target = $region20
        $region19: #{tpu_custom_call.1} parent=15 // pred_region
          %s130 = sand.u32 %s38, 1
          %s131 = scalar_lea.sflag [#allocation6], %s130
          %s132 = sand.u32 %s38, 1
          %s133 = smul.addr %s132, 8
          %s134 = scalar_lea.vmem [#allocation5], %s133
          %s135 = smul.u32 2, %s22
          %137 = vsyncadd %s131, 0
          %s138 = smul.addr %s21, 2
          %s139 = sadd.s32 %s135, %s138
          %s140 = smul.addr %s139, 4
          %s141 = scalar_lea.hbm %s0, %s140
          %s143 = sshll.u32 %s141, 4
          %s144 = int_to_ptr.hbm [resolvable:$true] %s143
          %s145 = sshll.u32 %s134, 4
          %s146 = int_to_ptr.vmem [resolvable:$true] %s145
          %148 = dma.hbm_to_vmem [thread:$0]  %s144, 128, %s146, %s131
        $region20: #{tpu_custom_call.1} parent=15 // pred_fallthru
          _
        // Predicated region
        $region21: #{tpu_custom_call.1} parent=15 // pred_check
          %p149 = pneg %p76
        $region22: #{tpu_custom_call.1} parent=15 // pred_check_branch
          %151 = sbr.rel (%p149) target = $region24
        $region23: #{tpu_custom_call.1} parent=15 // pred_region
          %s152 = sand.u32 %s66, 1
          %s153 = scalar_lea.sflag [#allocation8], %s152
          %s154 = sand.u32 %s66, 1
          %s155 = smul.addr %s154, 2
          %s156 = scalar_lea.vmem [#allocation7], %s155
          %s157 = smul.u32 2, %s22
          %159 = vsyncadd %s153, 0
          %s160 = smul.addr %s21, 2
          %s161 = sadd.s32 %s157, %s160
          %s162 = scalar_lea.hbm %s1, %s161
          %s164 = sshll.u32 %s162, 4
          %s165 = int_to_ptr.hbm [resolvable:$true] %s164
          %s166 = sshll.u32 %s156, 4
          %s167 = int_to_ptr.vmem [resolvable:$true] %s166
          %169 = dma.hbm_to_vmem [thread:$0]  %s165, 32, %s167, %s153
        $region24: #{tpu_custom_call.1} parent=15 // pred_fallthru
          _
      $region16: #{tpu_custom_call.1} parent=5 // pred_fallthru
        _
      %p170 = scmp.le.s32.totalorder 1, %s14
      %p171 = scmp.lt.s32.totalorder %s14, 3
      %p172 = pnand %p170, %p171
      %p173 = pneg %p172
      // Predicated region
      $region25: #{tpu_custom_call.1} parent=5 // pred_check
        _
      $region26: #{tpu_custom_call.1} parent=5 // pred_check_branch
        %175 = sbr.rel (%p172) target = $region28
      $region27: #{tpu_custom_call.1} parent=5 // pred_region
        %s176 = ssub.s32 %s14, 1
        %s177 = sand.u32 %s41, 1
        %s178 = scalar_lea.sflag [#allocation6], %s177
        %s179 = sand.u32 %s41, 1
        %s180 = smul.addr %s179, 8
        %s181 = scalar_lea.vmem [#allocation5], %s180
        // Predicated region
        $region29: #{tpu_custom_call.1} parent=27 // pred_check
          %p182 = pneg %p54
        $region30: #{tpu_custom_call.1} parent=27 // pred_check_branch
          %184 = sbr.rel (%p182) target = $region32
        $region31: #{tpu_custom_call.1} parent=27 // pred_region
          %186 = dma.done %s178, 128
        $region32: #{tpu_custom_call.1} parent=27 // pred_fallthru
          _
        %s187 = sand.u32 %s69, 1
        %s188 = scalar_lea.sflag [#allocation8], %s187
        %s189 = sand.u32 %s69, 1
        %s190 = smul.addr %s189, 2
        %s191 = scalar_lea.vmem [#allocation7], %s190
        // Predicated region
        $region33: #{tpu_custom_call.1} parent=27 // pred_check
          %p192 = pneg %p82
        $region34: #{tpu_custom_call.1} parent=27 // pred_check_branch
          %194 = sbr.rel (%p192) target = $region36
        $region35: #{tpu_custom_call.1} parent=27 // pred_region
          %196 = dma.done %s188, 32
        $region36: #{tpu_custom_call.1} parent=27 // pred_fallthru
          _
        %s197 = sand.u32 %s41, 1
        %s198 = scalar_lea.sflag [#allocation6], %s197
        %s199 = sand.u32 %s41, 1
        %s200 = smul.addr %s199, 8
        %s201 = scalar_lea.vmem [#allocation5], %s200
        %p202 = pneg %p54
        %p203 = pneg %p51
        %s204 = sand.u32 %s69, 1
        %s205 = scalar_lea.sflag [#allocation8], %s204
        %s206 = sand.u32 %s69, 1
        %s207 = smul.addr %s206, 2
        %s208 = scalar_lea.vmem [#allocation7], %s207
        %p209 = pneg %p82
        %p210 = pneg %p79
        %p211 = pneg %p108
        %p212 = pneg %p105
        %p213 = scmp.lt.s32.totalorder %s23, 1
        %s214 = scalar_select %p213, %s23, 1
        %s215 = smul.addr %s214, 4
        %s216 = scalar_lea.vmem %s2, %s215
        %s217 = smul.u32 2, %s24
        %s218 = smul.u32 2, %s24
        %p219 = scmp.lt.s32.totalorder %s23, 1
        %s220 = scalar_select %p219, %s23, 1
        %s221 = smul.addr %s220, 4
        %s222 = scalar_lea.vmem %s2, %s221
        %p223 = scmp.eq.s32.totalorder %s24, 0
        // Predicated region
        $region37: #{tpu_custom_call.1} parent=27 // pred_check
          %p224 = pneg %p223
        $region38: #{tpu_custom_call.1} parent=27 // pred_check_branch
          %226 = sbr.rel (%p224) target = $region40
        $region39: #{tpu_custom_call.1} parent=27 // pred_region
          %vm227 = vcmask 3072
          %228 = vst.msk [vmem:[#allocation2] sm:$0xf] %vm227, 0.0
          %229 = vst.msk [vmem:[#allocation3] sm:$0xf] %vm227, 0.0
          %230 = vst.msk [vmem:[#allocation4] sm:$0xf] %vm227, 0.0
        $region40: #{tpu_custom_call.1} parent=27 // pred_fallthru
          _
        %v231 = vld [vmem:[%s181] sm:$0xff]
        %v232 = vld [vmem:[%s191] sm:$0x3]
        %234 = vst [vmem:[#allocation1] ss:$2 sm:$0xff] %v231
        %v235 = vld.sshfl [vmem:[#allocation1] sm:$0xff pattern:$0x75316420]
        %v236 = vld.sshfl [vmem:[#allocation1 + $0x8] sm:$0xff pattern:$0x75316420]
        %vm239 = vcmask 1043456
        %v240 = vsel %vm239, %v235, -inf
        %v241 = vrot.slane %v240, 4
        %v242 = vmax.f32 %v240, %v241
        %v243 = vrot.slane %v242, 2
        %v244 = vmax.f32 %v242, %v243
        %v245 = vrot.slane %v244, 1
        %v246 = vmax.f32 %v244, %v245
        %v247 = vsel %vm239, %v236, -inf
        %v248 = vrot.slane %v247, 4
        %v249 = vmax.f32 %v247, %v248
        %v250 = vrot.slane %v249, 2
        %v251 = vmax.f32 %v249, %v250
        %v252 = vrot.slane %v251, 1
        %v253 = vmax.f32 %v251, %v252
        %v256 = vrot.slane %v253, 4
        %v257 = vsel %vm239, %v246, %v256
        %v259 = vsub.f32 %v231, %v257
        %v260 = vmul.f32 %v259, 1.442695
        %v261 = vpow.pop %v260
        %263 = vst [vmem:[#allocation1] ss:$2 sm:$0xff] %v261
        %v264 = vld.sshfl [vmem:[#allocation1] sm:$0xff pattern:$0x75316420]
        %v265 = vld.sshfl [vmem:[#allocation1 + $0x8] sm:$0xff pattern:$0x75316420]
        %v268 = vsel %vm239, %v264, 0.0
        %v269 = vrot.slane %v268, 4
        %v270 = vadd.f32 %v268, %v269
        %v271 = vrot.slane %v270, 2
        %v272 = vadd.f32 %v270, %v271
        %v273 = vrot.slane %v272, 1
        %v274 = vadd.f32 %v272, %v273
        %v275 = vsel %vm239, %v265, 0.0
        %v276 = vrot.slane %v275, 4
        %v277 = vadd.f32 %v275, %v276
        %v278 = vrot.slane %v277, 2
        %v279 = vadd.f32 %v277, %v278
        %v280 = vrot.slane %v279, 1
        %v281 = vadd.f32 %v279, %v280
        %v282 = vrcp.pop %v274
        %v283 = vrcp.pop %v281
        %v284 = vmul.f32 %v274, %v282
        %v285 = vmul.f32 %v281, %v283
        %v286 = vsub.f32 2.0, %v284
        %v287 = vsub.f32 2.0, %v285
        %v288 = vmul.f32 %v282, %v286
        %v289 = vmul.f32 %v283, %v287
        %v290 = vmul.f32 %v274, %v288
        %v291 = vmul.f32 %v281, %v289
        %v292 = vsub.f32 2.0, %v290
        %v293 = vsub.f32 2.0, %v291
        %v294 = vmul.f32 %v288, %v292
        %v295 = vmul.f32 %v289, %v293
        %v298 = vrot.slane %v295, 4
        %v299 = vsel %vm239, %v294, %v298
        %v301 = vmul.f32 %v261, %v299
        %v302 = vlaneseq
        %v303 = vshrl.u32 %v302, 7
        %vm304 = vcmp.ne.s32.totalorder %v232, 4294967295
        %v305 = vperm.slane %v232, 0
        %v306 = vperm.slane %v232, 1
        %vm307 = vcmp.eq.s32.totalorder %v303, %v305
        %vm308 = vcmp.eq.s32.totalorder %v303, %v306
        %v309 = vsel %vm304, 1, 0
        %v310 = vperm.slane %v309, 0
        %v311 = vperm.slane %v309, 1
        %vm312 = vcmp.eq.s32.totalorder %v310, 1
        %vm313 = vcmp.eq.s32.totalorder %v311, 1
        %vm314 = vmand %vm307, %vm312
        %vm315 = vmand %vm308, %vm313
        %317 = vst [vmem:[#allocation1] ss:$2 sm:$0xff] %v301
        %v318 = vld.sshfl [vmem:[#allocation1] sm:$0xff pattern:$0x75316420]
        %v319 = vld.sshfl [vmem:[#allocation1 + $0x8] sm:$0xff pattern:$0x75316420]
        %v322 = vsel %vm314, %v318, 0.0
        %v323 = vsel %vm315, %v319, 0.0
        %v324 = vsel %vm239, %v322, 0.0
        %v325 = vsel %vm239, %v323, 0.0
        %v326 = vadd.f32 %v324, %v325
        %327 = vadd.xlane.f32.xlu0 %v326
        %v328 = vpop.xlane.xlu0 %327
        %329 = vst [vmem:[#allocation1] ss:$2 sm:$0xff] %v301
        %v330 = vld.sshfl [vmem:[#allocation1] sm:$0xff pattern:$0x75316420]
        %v331 = vld.sshfl [vmem:[#allocation1 + $0x8] sm:$0xff pattern:$0x75316420]
        %v334 = vsel %vm239, %v330, 0.0
        %v335 = vsel %vm239, %v331, 0.0
        %v336 = vadd.f32 %v334, %v335
        %337 = vadd.xlane.f32.xlu0 %v336
        %v338 = vpop.xlane.xlu0 %337
        %v339 = vsel %vm314, 1, 0
        %v340 = vsel %vm315, 1, 0
        %v341 = vcvt.s32.f32 %v339
        %v342 = vcvt.s32.f32 %v340
        %v343 = vsel %vm239, %v341, 0.0
        %v344 = vsel %vm239, %v342, 0.0
        %v345 = vadd.f32 %v343, %v344
        %346 = vadd.xlane.f32.xlu0 %v345
        %v347 = vpop.xlane.xlu0 %346
        %v348 = vld [vmem:[#allocation2] sm:$0xf]
        %v349 = vadd.f32 %v348, %v328
        %vm350 = vcmask 3072
        %351 = vst.msk [vmem:[#allocation2] sm:$0xf] %vm350, %v349
        %v352 = vld [vmem:[#allocation3] sm:$0xf]
        %v353 = vadd.f32 %v352, %v338
        %354 = vst.msk [vmem:[#allocation3] sm:$0xf] %vm350, %v353
        %v355 = vld [vmem:[#allocation4] sm:$0xf]
        %v356 = vadd.f32 %v355, %v347
        %357 = vst.msk [vmem:[#allocation4] sm:$0xf] %vm350, %v356
        // Predicated region
        $region41: #{tpu_custom_call.1} parent=27 // pred_check
          %p358 = pneg %p223
        $region42: #{tpu_custom_call.1} parent=27 // pred_check_branch
          %360 = sbr.rel (%p358) target = $region44
        $region43: #{tpu_custom_call.1} parent=27 // pred_region
          %v361 = vld [vmem:[#allocation2] sm:$0xf]
          %362 = vst.msk [vmem:[%s222] sm:$0xf] %vm350, %v361
          %v363 = vld [vmem:[#allocation3] sm:$0xf]
          %v364 = vsub.f32 %v363, %v361
          %366 = vrot.lane.b32.xlu0 %v364, 1
          %v367 = vpop.permute.xlu0 %366
          %vm369 = vcmask 11272
          %370 = vst.msk [vmem:[%s222] sm:$0xf] %vm369, %v367
          %v371 = vld [vmem:[#allocation4] sm:$0xf]
          %v372 = vsub.f32 %v371, %v361
          %374 = vrot.lane.b32.xlu0 %v372, 2
          %v375 = vpop.permute.xlu0 %374
          %vm377 = vcmask 19472
          %378 = vst.msk [vmem:[%s222] sm:$0xf] %vm377, %v375
        $region44: #{tpu_custom_call.1} parent=27 // pred_fallthru
          _
        %p379 = scmp.lt.s32.totalorder %s23, 1
        %s380 = scalar_select %p379, %s23, 1
        %s381 = smul.addr %s380, 4
        %s382 = scalar_lea.vmem %s2, %s381
        // Predicated region
        $region45: #{tpu_custom_call.1} parent=27 // pred_check
          %p383 = pneg %p105
        $region46: #{tpu_custom_call.1} parent=27 // pred_check_branch
          %385 = sbr.rel (%p383) target = $region48
        $region47: #{tpu_custom_call.1} parent=27 // pred_region
          _
        $region48: #{tpu_custom_call.1} parent=27 // pred_fallthru
          _
      $region28: #{tpu_custom_call.1} parent=5 // pred_fallthru
        _
      %p386 = scmp.le.s32.totalorder 2, %s14
      // Predicated region
      $region49: #{tpu_custom_call.1} parent=5 // pred_check
        %p387 = pneg %p386
      $region50: #{tpu_custom_call.1} parent=5 // pred_check_branch
        %389 = sbr.rel (%p387) target = $region52
      $region51: #{tpu_custom_call.1} parent=5 // pred_region
        %s390 = ssub.s32 %s14, 2
        // Predicated region
        $region53: #{tpu_custom_call.1} parent=51 // pred_check
          %p391 = pneg %p111
        $region54: #{tpu_custom_call.1} parent=51 // pred_check_branch
          %393 = sbr.rel (%p391) target = $region56
        $region55: #{tpu_custom_call.1} parent=51 // pred_region
          %p394 = scmp.lt.s32.totalorder %s25, 1
          %s395 = scalar_select %p394, %s25, 1
          %s396 = smul.addr %s395, 4
          %s397 = scalar_lea.vmem %s2, %s396
        $region56: #{tpu_custom_call.1} parent=51 // pred_fallthru
          _
      $region52: #{tpu_custom_call.1} parent=5 // pred_fallthru
        _
    $region6: #{tpu_custom_call.1} parent=1 // loop_footer
      %s18 = sadd.s32 1, %s14
    $region7: #{tpu_custom_call.1} parent=1 // loop_footer_branch
      %13 = sbr.rel target = $region3
    $region8: #{tpu_custom_call.1} parent=1 // loop_exit
      _
    %398 = vsyncpa [#allocation6], 1
    %s399 = scalar_lea.sflag [#allocation6], 1
    %400 = vsyncpa %s399, 1
    %401 = vsyncpa [#allocation8], 1
    %s402 = scalar_lea.sflag [#allocation8], 1
    %403 = vsyncpa %s402, 1

</llo_original>
